<compile_context>
chip_gen: v7x
topology: tpu7x:2x2x1
jax: 0.10.0
libtpu: 0.0.40
codegen_flags: <defaults>
</compile_context>

<pallas_src>
import functools

import jax
import jax.numpy as jnp
from jax import lax
from jax.experimental import pallas as pl
from jax.experimental.pallas import tpu as pltpu

EPS = 1e-12  # F.normalize default eps


# ---------------------------------------------------------------------------
# Fused multi-layer kernel.
# Per grid step l (one GNN layer), with E = layer-l embeddings (VMEM scratch):
#   gnn    = G @ E                                   (torch_sparse.spmm)
#   scores = cos(gnn[u], gnn[i]) + 1  on u->i edges  (0.5 scale cancels)
#   Du/Di  = row/col sums of scores, ^-1, inf->0     (nan_to_num)
#   fine_u = Du_inv * (S  @ E_items)
#   fine_i = (S * Di_inv)^T @ E_users
#   E_next = gnn + [fine_u; fine_i];  sum += E_next
# ---------------------------------------------------------------------------
def _siurec_layers_kernel(g_ref, m_ref, e0_ref, sum_ref, fine_ref, e_scr,
                          *, num_users):
    U = num_users
    l = pl.program_id(0)

    @pl.when(l == 0)
    def _init():
        e_scr[...] = e0_ref[...]
        sum_ref[...] = e0_ref[...]          # all_embs[0] term of the sum

    E = e_scr[...]                          # (N, D) f32, layer-l embeddings
    Eb = E.astype(jnp.bfloat16)

    # --- coarse graph propagation (bf16 MXU, f32 accumulation) -------------
    gnn = jnp.dot(g_ref[...], Eb, preferred_element_type=jnp.float32)   # (N, D)

    # --- F.normalize(gnn, dim=1, eps=1e-12): rsqrt on EUP, mult on VPU -----
    ssq = jnp.sum(gnn * gnn, axis=-1, keepdims=True)
    normed = gnn * lax.rsqrt(jnp.maximum(ssq, EPS * EPS))

    nu = normed[:U].astype(jnp.bfloat16)    # (U, D)
    ni = normed[U:].astype(jnp.bfloat16)    # (I, D)

    # --- bipartite cosine scores, masked to the user->item half edges ------
    sim = lax.dot_general(nu, ni, (((1,), (1,)), ((), ())),
                          preferred_element_type=jnp.float32)            # (U, I)
    # (cos + 1); the reference's extra * 0.5 is a uniform scale on S that
    # cancels exactly against the row/col-sum normalization below.
    S = jnp.where(m_ref[...] > 0, sim + 1.0, 0.0)

    # --- degree normalization, pow(-1).nan_to_num(0) semantics -------------
    Du = jnp.sum(S, axis=1, keepdims=True)          # (U, 1)
    Di = jnp.sum(S, axis=0, keepdims=True)          # (1, I)
    Du_inv = jnp.where(Du > 0.0, 1.0 / Du, 0.0)
    Di_inv = jnp.where(Di > 0.0, 1.0 / Di, 0.0)

    Eu_b = E[:U].astype(jnp.bfloat16)               # (U, D)
    Ei_b = E[U:].astype(jnp.bfloat16)               # (I, D)

    # fine[u] = Du_inv[u] * sum_i S[u,i] E[i]    (row scale after the matmul)
    fine_u = Du_inv * jnp.dot(S.astype(jnp.bfloat16), Ei_b,
                              preferred_element_type=jnp.float32)        # (U, D)
    # fine[i] = Di_inv[i] * sum_u S[u,i] E[u]    (lane-aligned column scale)
    fine_i = lax.dot_general((S * Di_inv).astype(jnp.bfloat16), Eu_b,
                             (((0,), (0,)), ((), ())),
                             preferred_element_type=jnp.float32)         # (I, D)

    fine = jnp.concatenate([fine_u, fine_i], axis=0)                     # (N, D)
    e_next = gnn + fine

    fine_ref[0] = fine                       # per-layer fine interests output
    e_scr[...] = e_next                      # carry E to the next layer
    sum_ref[...] = sum_ref[...] + e_next     # running sum over layers


def siurec_forward(G, A_ui_mask, user_emb, item_emb, n_layers):
    """Mirrors SIURec.forward().  Returns (u_embs, i_embs, user_fine, item_fine)."""
    num_users, D = user_emb.shape
    num_items = item_emb.shape[0]
    N = num_users + num_items

    E0 = jnp.concatenate([user_emb, item_emb], axis=0).astype(jnp.float32)
    G_b = G.astype(jnp.bfloat16)             # halves HBM->VMEM bytes for N^2 array
    M_b = A_ui_mask.astype(jnp.bfloat16)     # (U, I) half-edge mask

    # advisory cost estimate for XLA's scheduler
    flops = int(n_layers * (2 * N * N * D + 3 * 2 * num_users * num_items * D))
    bytes_accessed = int(2 * N * N + 2 * num_users * num_items
                         + 4 * N * D * (2 + n_layers))
    cost = pl.CostEstimate(flops=flops, transcendentals=int(n_layers * N),
                           bytes_accessed=bytes_accessed)

    # scoped VMEM sized from the actual footprint (inputs + outputs + temps),
    # with headroom, clamped to a range that is valid on v5e/v6e/v7x.
    need = (2 * (2 * N * N + 2 * num_users * num_items + 4 * N * D)   # inputs (2-buf)
            + 4 * N * D * 4                                           # outputs (2-buf)
            + 4 * N * D                                               # E scratch
            + 4 * (N * N + 4 * num_users * num_items + 8 * N * D))    # temps
    vmem_limit = int(min(100 * 1024 * 1024, max(4 * 1024 * 1024, 2 * need)))

    sum_all, fine_all = pl.pallas_call(
        functools.partial(_siurec_layers_kernel, num_users=num_users),
        out_shape=(jax.ShapeDtypeStruct((N, D), jnp.float32),
                   jax.ShapeDtypeStruct((n_layers, N, D), jnp.float32)),
        grid=(n_layers,),
        in_specs=[
            pl.BlockSpec((N, N), lambda l: (0, 0)),                 # G (resident)
            pl.BlockSpec((num_users, num_items), lambda l: (0, 0)), # mask (resident)
            pl.BlockSpec((N, D), lambda l: (0, 0)),                 # E0 (resident)
        ],
        out_specs=(
            pl.BlockSpec((N, D), lambda l: (0, 0)),                 # running sum
            pl.BlockSpec((1, N, D), lambda l: (l, 0, 0)),           # per-layer fine
        ),
        scratch_shapes=[pltpu.VMEM((N, D), jnp.float32)],           # carried E
        compiler_params=pltpu.CompilerParams(
            dimension_semantics=("arbitrary",),                     # layers are sequential
            vmem_limit_bytes=vmem_limit),
        cost_estimate=cost,
    )(G_b, M_b, E0)

    user_fine = [fine_all[l, :num_users] for l in range(n_layers)]
    item_fine = [fine_all[l, num_users:] for l in range(n_layers)]
    return sum_all[:num_users], sum_all[num_users:], user_fine, item_fine


# ---------------------------------------------------------------------------
# Pure-JAX references.
#  * _ref_forward_mixed : same math / same bf16 casts as the kernel (tight check)
#  * _ref_forward_f32   : torch-faithful f32 math, (cos+1)/2 scale, divide
#                         normalize (loose check -> semantics preserved)
# ---------------------------------------------------------------------------
def _ref_forward_mixed(G, M, user_emb, item_emb, n_layers):
    U = user_emb.shape[0]
    G_b = G.astype(jnp.bfloat16)
    E = jnp.concatenate([user_emb, item_emb], axis=0).astype(jnp.float32)
    all_sum = E
    fines = []
    for _ in range(n_layers):
        Eb = E.astype(jnp.bfloat16)
        gnn = jnp.dot(G_b, Eb, preferred_element_type=jnp.float32)
        ssq = jnp.sum(gnn * gnn, axis=-1, keepdims=True)
        normed = gnn * lax.rsqrt(jnp.maximum(ssq, EPS * EPS))
        nu = normed[:U].astype(jnp.bfloat16)
        ni = normed[U:].astype(jnp.bfloat16)
        sim = jnp.dot(nu, ni.T, preferred_element_type=jnp.float32)
        S = jnp.where(M > 0, sim + 1.0, 0.0)
        Du = jnp.sum(S, axis=1, keepdims=True)
        Di = jnp.sum(S, axis=0, keepdims=True)
        Du_inv = jnp.where(Du > 0.0, 1.0 / Du, 0.0)
        Di_inv = jnp.where(Di > 0.0, 1.0 / Di, 0.0)
        Eu_b = E[:U].astype(jnp.bfloat16)
        Ei_b = E[U:].astype(jnp.bfloat16)
        fine_u = Du_inv * jnp.dot(S.astype(jnp.bfloat16), Ei_b,
                                  preferred_element_type=jnp.float32)
        fine_i = jnp.dot((S * Di_inv).astype(jnp.bfloat16).T, Eu_b,
                         preferred_element_type=jnp.float32)
        fine = jnp.concatenate([fine_u, fine_i], axis=0)
        E = gnn + fine
        all_sum = all_sum + E
        fines.append(fine)
    return all_sum[:U], all_sum[U:], fines


def _ref_forward_f32(G, M, user_emb, item_emb, n_layers):
    U = user_emb.shape[0]
    E = jnp.concatenate([user_emb, item_emb], axis=0)
    all_sum = E
    for _ in range(n_layers):
        gnn = G @ E
        nrm = jnp.sqrt(jnp.sum(gnn * gnn, axis=-1, keepdims=True))
        normed = gnn / jnp.maximum(nrm, EPS)
        sim = normed[:U] @ normed[U:].T
        S = M * (sim + 1.0) * 0.5                 # original torch scaling
        Du = jnp.sum(S, axis=1, keepdims=True)
        Di = jnp.sum(S, axis=0, keepdims=True)
        Du_inv = jnp.where(Du > 0.0, 1.0 / Du, 0.0)
        Di_inv = jnp.where(Di > 0.0, 1.0 / Di, 0.0)
        fine_u = (Du_inv * S) @ E[U:]
        fine_i = (S * Di_inv).T @ E[:U]
        fine = jnp.concatenate([fine_u, fine_i], axis=0)
        E = gnn + fine
        all_sum = all_sum + E
    return all_sum[:U], all_sum[U:]


if __name__ == "__main__":
    # small, forward-consistent shapes
    num_users, num_items, emb_size, n_layers = 8, 16, 32, 2
    N = num_users + num_items

    # deterministic bipartite interaction graph (every user & item has degree>0)
    edges = [(u, it) for u in range(num_users) for it in range(num_items)
             if (u + it) % 3 == 0]
    rows_half = jnp.array([u for u, _ in edges], dtype=jnp.int32)
    cols_half = jnp.array([num_users + it for _, it in edges], dtype=jnp.int32)

    # (U, I) user->item half-edge mask (bipartite block of the adjacency)
    M_ui = jnp.zeros((num_users, num_items), jnp.float32).at[
        rows_half, cols_half - num_users].set(1.0)

    # full symmetric adjacency + laplacian_adj(): G = D^{-1/2} A D^{-1/2}
    A_full = jnp.zeros((N, N), jnp.float32)
    A_full = A_full.at[rows_half, cols_half].set(1.0)
    A_full = A_full.at[cols_half, rows_half].set(1.0)
    deg = jnp.sum(A_full, axis=1)
    d_inv_sqrt = jnp.where(deg > 0.0, 1.0 / jnp.sqrt(deg), 0.0)
    G = d_inv_sqrt[:, None] * A_full * d_inv_sqrt[None, :]

    # xavier_normal_ embedding init, deterministic
    key = jax.random.PRNGKey(0)
    ku, ki = jax.random.split(key)
    std_u = (2.0 / (num_users + emb_size)) ** 0.5
    std_i = (2.0 / (num_items + emb_size)) ** 0.5
    user_emb = std_u * jax.random.normal(ku, (num_users, emb_size), jnp.float32)
    item_emb = std_i * jax.random.normal(ki, (num_items, emb_size), jnp.float32)

    u_sum, i_sum, user_fine, item_fine = siurec_forward(
        G, M_ui, user_emb, item_emb, n_layers)
    jax.block_until_ready((u_sum, i_sum, user_fine, item_fine))

    # references
    u_m, i_m, fines_m = _ref_forward_mixed(G, M_ui, user_emb, item_emb, n_layers)
    u_f, i_f = _ref_forward_f32(G, M_ui, user_emb, item_emb, n_layers)

    assert u_sum.shape == (num_users, emb_size)
    assert i_sum.shape == (num_items, emb_size)
    assert len(user_fine) == n_layers and len(item_fine) == n_layers

    # tight check vs the matched-precision (bf16-matmul) reference
    assert jnp.allclose(u_sum, u_m, atol=1e-3, rtol=1e-3)
    assert jnp.allclose(i_sum, i_m, atol=1e-3, rtol=1e-3)
    for l in range(n_layers):
        assert jnp.allclose(user_fine[l], fines_m[l][:num_users], atol=1e-3, rtol=1e-3)
        assert jnp.allclose(item_fine[l], fines_m[l][num_users:], atol=1e-3, rtol=1e-3)

    # loose check vs the torch-faithful full-f32 reference (bf16 matmul deviation)
    assert jnp.allclose(u_sum, u_f, atol=5e-2, rtol=5e-2)
    assert jnp.allclose(i_sum, i_f, atol=5e-2, rtol=5e-2)

    print("KERNEL_OK")
</pallas_src>

<mosaic_0001>
module attributes {stable_mosaic.version = 11 : i64} {
  func.func @_siurec_layers_kernel(%arg0: i32, %arg1: memref<24x24xbf16, #tpu.memory_space<vmem>>, %arg2: memref<8x16xbf16, #tpu.memory_space<vmem>>, %arg3: memref<24x32xf32, #tpu.memory_space<vmem>>, %arg4: memref<24x32xf32, #tpu.memory_space<vmem>>, %arg5: memref<1x24x32xf32, #tpu.memory_space<vmem>>, %arg6: memref<24x32xf32, #tpu.memory_space<vmem>>) attributes {dimension_semantics = [#tpu.dimension_semantics<arbitrary>], iteration_bounds = array<i64: 2>, scalar_prefetch = 0 : i64, scratch_operands = 1 : i64, tpu.core_type = #tpu.core_type<tc>, window_params = [{pipeline_mode = #tpu.pipeline_mode<synchronous>, transform_indices = @transform_0, window_bounds = array<i64: 24, 24>}, {pipeline_mode = #tpu.pipeline_mode<synchronous>, transform_indices = @transform_1, window_bounds = array<i64: 8, 16>}, {pipeline_mode = #tpu.pipeline_mode<synchronous>, transform_indices = @transform_2, window_bounds = array<i64: 24, 32>}, {pipeline_mode = #tpu.pipeline_mode<synchronous>, transform_indices = @transform_3, window_bounds = array<i64: 24, 32>}, {transform_indices = @transform_4, window_bounds = array<i64: 1, 24, 32>}]} {
    %c0_i32 = arith.constant 0 : i32
    %0 = arith.cmpi eq, %arg0, %c0_i32 : i32
    %1 = arith.extui %0 : i1 to i32
    %c0_i32_0 = arith.constant 0 : i32
    %2 = arith.cmpi ne, %1, %c0_i32_0 : i32
    scf.if %2 {
      %c0_31 = arith.constant 0 : index
      %c0_32 = arith.constant 0 : index
      %64 = vector.load %arg3[%c0_31, %c0_32] : memref<24x32xf32, #tpu.memory_space<vmem>>, vector<24x32xf32>
      %c0_33 = arith.constant 0 : index
      %c0_34 = arith.constant 0 : index
      %65 = vector.load %arg6[%c0_33, %c0_34] : memref<24x32xf32, #tpu.memory_space<vmem>>, vector<24x32xf32>
      tpu.vector_store %arg6[%c0_33, %c0_34], %64 {strides = array<i32>} : memref<24x32xf32, #tpu.memory_space<vmem>>, vector<24x32xf32>,
      %c0_35 = arith.constant 0 : index
      %c0_36 = arith.constant 0 : index
      %66 = vector.load %arg3[%c0_35, %c0_36] : memref<24x32xf32, #tpu.memory_space<vmem>>, vector<24x32xf32>
      %c0_37 = arith.constant 0 : index
      %c0_38 = arith.constant 0 : index
      %67 = vector.load %arg4[%c0_37, %c0_38] : memref<24x32xf32, #tpu.memory_space<vmem>>, vector<24x32xf32>
      tpu.vector_store %arg4[%c0_37, %c0_38], %66 {strides = array<i32>} : memref<24x32xf32, #tpu.memory_space<vmem>>, vector<24x32xf32>,
    } else {
    }
    %c0 = arith.constant 0 : index
    %c0_1 = arith.constant 0 : index
    %3 = vector.load %arg6[%c0, %c0_1] : memref<24x32xf32, #tpu.memory_space<vmem>>, vector<24x32xf32>
    %4 = arith.truncf %3 : vector<24x32xf32> to vector<24x32xbf16>
    %c0_2 = arith.constant 0 : index
    %c0_3 = arith.constant 0 : index
    %5 = vector.load %arg1[%c0_2, %c0_3] : memref<24x24xbf16, #tpu.memory_space<vmem>>, vector<24x24xbf16>
    %cst = arith.constant dense<0.000000e+00> : vector<24x32xf32>
    %6 = tpu.matmul %5, %4, %cst {dimension_numbers = #tpu.dot_dimension_numbers<[1], [0], [0], [1], [0, 0, 1, 1], [], []>} : vector<24x24xbf16>, vector<24x32xbf16>, vector<24x32xf32> -> vector<24x32xf32>
    %7 = arith.mulf %6, %6 : vector<24x32xf32>
    %cst_4 = arith.constant dense<0.000000e+00> : vector<24xf32>
    %8 = vector.multi_reduction <add>, %7, %cst_4 [1] : vector<24x32xf32> to vector<24xf32>
    %9 = vector.shape_cast %8 : vector<24xf32> to vector<24x1xf32>
    %cst_5 = arith.constant 1.000000e-24 : f32
    %10 = vector.broadcast %cst_5 : f32 to vector<24x1xf32>
    %11 = arith.maximumf %9, %10 : vector<24x1xf32>
    %12 = math.rsqrt %11 : vector<24x1xf32>
    %13 = vector.broadcast %12 : vector<24x1xf32> to vector<24x32xf32>
    %14 = arith.mulf %6, %13 : vector<24x32xf32>
    %15 = vector.extract_strided_slice %14 {offsets = [0, 0], sizes = [8, 32], strides = [1, 1]} : vector<24x32xf32> to vector<8x32xf32>
    %16 = arith.truncf %15 : vector<8x32xf32> to vector<8x32xbf16>
    %17 = vector.extract_strided_slice %14 {offsets = [8, 0], sizes = [16, 32], strides = [1, 1]} : vector<24x32xf32> to vector<16x32xf32>
    %18 = arith.truncf %17 : vector<16x32xf32> to vector<16x32xbf16>
    %cst_6 = arith.constant dense<0.000000e+00> : vector<8x16xf32>
    %19 = tpu.matmul %16, %18, %cst_6 {dimension_numbers = #tpu.dot_dimension_numbers<[1], [1], [0], [0], [0, 0, 1, 0], [], []>} : vector<8x32xbf16>, vector<16x32xbf16>, vector<8x16xf32> -> vector<8x16xf32>
    %c0_7 = arith.constant 0 : index
    %c0_8 = arith.constant 0 : index
    %20 = vector.load %arg2[%c0_7, %c0_8] : memref<8x16xbf16, #tpu.memory_space<vmem>>, vector<8x16xbf16>
    %cst_9 = arith.constant 0.000000e+00 : bf16
    %21 = vector.broadcast %cst_9 : bf16 to vector<8x16xbf16>
    %22 = arith.cmpf ogt, %20, %21 : vector<8x16xbf16>
    %cst_10 = arith.constant 1.000000e+00 : f32
    %23 = vector.broadcast %cst_10 : f32 to vector<8x16xf32>
    %24 = arith.addf %19, %23 : vector<8x16xf32>
    %cst_11 = arith.constant 0.000000e+00 : f32
    %25 = vector.broadcast %cst_11 : f32 to vector<8x16xf32>
    %26 = arith.select %22, %24, %25 : vector<8x16xi1>, vector<8x16xf32>
    %cst_12 = arith.constant dense<0.000000e+00> : vector<8xf32>
    %27 = vector.multi_reduction <add>, %26, %cst_12 [1] : vector<8x16xf32> to vector<8xf32>
    %28 = vector.shape_cast %27 : vector<8xf32> to vector<8x1xf32>
    %cst_13 = arith.constant dense<0.000000e+00> : vector<16xf32>
    %29 = vector.multi_reduction <add>, %26, %cst_13 [0] : vector<8x16xf32> to vector<16xf32>
    %30 = vector.shape_cast %29 : vector<16xf32> to vector<1x16xf32>
    %cst_14 = arith.constant 0.000000e+00 : f32
    %31 = vector.broadcast %cst_14 : f32 to vector<8x1xf32>
    %32 = arith.cmpf ogt, %28, %31 : vector<8x1xf32>
    %cst_15 = arith.constant 1.000000e+00 : f32
    %33 = vector.broadcast %cst_15 : f32 to vector<8x1xf32>
    %34 = arith.divf %33, %28 : vector<8x1xf32>
    %cst_16 = arith.constant 0.000000e+00 : f32
    %35 = vector.broadcast %cst_16 : f32 to vector<8x1xf32>
    %36 = arith.select %32, %34, %35 : vector<8x1xi1>, vector<8x1xf32>
    %cst_17 = arith.constant 0.000000e+00 : f32
    %37 = vector.broadcast %cst_17 : f32 to vector<1x16xf32>
    %38 = arith.cmpf ogt, %30, %37 : vector<1x16xf32>
    %cst_18 = arith.constant 1.000000e+00 : f32
    %39 = vector.broadcast %cst_18 : f32 to vector<1x16xf32>
    %40 = arith.divf %39, %30 : vector<1x16xf32>
    %cst_19 = arith.constant 0.000000e+00 : f32
    %41 = vector.broadcast %cst_19 : f32 to vector<1x16xf32>
    %42 = arith.select %38, %40, %41 : vector<1x16xi1>, vector<1x16xf32>
    %43 = vector.extract_strided_slice %3 {offsets = [0, 0], sizes = [8, 32], strides = [1, 1]} : vector<24x32xf32> to vector<8x32xf32>
    %44 = arith.truncf %43 : vector<8x32xf32> to vector<8x32xbf16>
    %45 = vector.extract_strided_slice %3 {offsets = [8, 0], sizes = [16, 32], strides = [1, 1]} : vector<24x32xf32> to vector<16x32xf32>
    %46 = arith.truncf %45 : vector<16x32xf32> to vector<16x32xbf16>
    %47 = arith.truncf %26 : vector<8x16xf32> to vector<8x16xbf16>
    %cst_20 = arith.constant dense<0.000000e+00> : vector<8x32xf32>
    %48 = tpu.matmul %47, %46, %cst_20 {dimension_numbers = #tpu.dot_dimension_numbers<[1], [0], [0], [1], [0, 0, 1, 1], [], []>} : vector<8x16xbf16>, vector<16x32xbf16>, vector<8x32xf32> -> vector<8x32xf32>
    %49 = vector.broadcast %36 : vector<8x1xf32> to vector<8x32xf32>
    %50 = arith.mulf %49, %48 : vector<8x32xf32>
    %51 = vector.broadcast %42 : vector<1x16xf32> to vector<8x16xf32>
    %52 = arith.mulf %26, %51 : vector<8x16xf32>
    %53 = arith.truncf %52 : vector<8x16xf32> to vector<8x16xbf16>
    %cst_21 = arith.constant dense<0.000000e+00> : vector<16x32xf32>
    %54 = tpu.matmul %53, %44, %cst_21 {dimension_numbers = #tpu.dot_dimension_numbers<[0], [0], [1], [1], [0, 1, 1, 1], [], []>} : vector<8x16xbf16>, vector<8x32xbf16>, vector<16x32xf32> -> vector<16x32xf32>
    %55 = tpu.concatenate %50, %54 in 0 : vector<8x32xf32>, vector<16x32xf32> -> vector<24x32xf32>
    %56 = arith.addf %6, %55 : vector<24x32xf32>
    %c0_22 = arith.constant 0 : index
    %c0_23 = arith.constant 0 : index
    %c0_24 = arith.constant 0 : index
    %57 = vector.load %arg5[%c0_22, %c0_23, %c0_24] : memref<1x24x32xf32, #tpu.memory_space<vmem>>, vector<1x24x32xf32>
    %58 = vector.shape_cast %57 : vector<1x24x32xf32> to vector<24x32xf32>
    %59 = vector.shape_cast %55 : vector<24x32xf32> to vector<1x24x32xf32>
    tpu.vector_store %arg5[%c0_22, %c0_23, %c0_24], %59 {strides = array<i32>} : memref<1x24x32xf32, #tpu.memory_space<vmem>>, vector<1x24x32xf32>,
    %c0_25 = arith.constant 0 : index
    %c0_26 = arith.constant 0 : index
    %60 = vector.load %arg6[%c0_25, %c0_26] : memref<24x32xf32, #tpu.memory_space<vmem>>, vector<24x32xf32>
    tpu.vector_store %arg6[%c0_25, %c0_26], %56 {strides = array<i32>} : memref<24x32xf32, #tpu.memory_space<vmem>>, vector<24x32xf32>,
    %c0_27 = arith.constant 0 : index
    %c0_28 = arith.constant 0 : index
    %61 = vector.load %arg4[%c0_27, %c0_28] : memref<24x32xf32, #tpu.memory_space<vmem>>, vector<24x32xf32>
    %62 = arith.addf %61, %56 : vector<24x32xf32>
    %c0_29 = arith.constant 0 : index
    %c0_30 = arith.constant 0 : index
    %63 = vector.load %arg4[%c0_29, %c0_30] : memref<24x32xf32, #tpu.memory_space<vmem>>, vector<24x32xf32>
    tpu.vector_store %arg4[%c0_29, %c0_30], %62 {strides = array<i32>} : memref<24x32xf32, #tpu.memory_space<vmem>>, vector<24x32xf32>,
    return
  }
  func.func @transform_0(%arg0: i32) -> (i32, i32) {
    %c0_i32 = arith.constant 0 : i32
    %c0_i32_0 = arith.constant 0 : i32
    %c0_i32_1 = arith.constant 0 : i32
    return %c0_i32, %c0_i32_0 : i32, i32
  }
  func.func @transform_1(%arg0: i32) -> (i32, i32) {
    %c0_i32 = arith.constant 0 : i32
    %c0_i32_0 = arith.constant 0 : i32
    %c0_i32_1 = arith.constant 0 : i32
    return %c0_i32, %c0_i32_0 : i32, i32
  }
  func.func @transform_2(%arg0: i32) -> (i32, i32) {
    %c0_i32 = arith.constant 0 : i32
    %c0_i32_0 = arith.constant 0 : i32
    %c0_i32_1 = arith.constant 0 : i32
    return %c0_i32, %c0_i32_0 : i32, i32
  }
  func.func @transform_3(%arg0: i32) -> (i32, i32) {
    %c0_i32 = arith.constant 0 : i32
    %c0_i32_0 = arith.constant 0 : i32
    %c0_i32_1 = arith.constant 0 : i32
    return %c0_i32, %c0_i32_0 : i32, i32
  }
  func.func @transform_4(%arg0: i32) -> (i32, i32, i32) {
    %c0_i32 = arith.constant 0 : i32
    %c0_i32_0 = arith.constant 0 : i32
    %c0_i32_1 = arith.constant 0 : i32
    return %arg0, %c0_i32, %c0_i32_0 : i32, i32, i32
  }
}

</mosaic_0001>

<llo_original>
// kernel: tpu_custom_call.1
$region0: #{tpu_custom_call.1}
  #allocation0 [shape = 'u32[]', space=smem, size = 0x4, offset = 0x4, fixed_abs, tag = 'smem constant byte address 0x4 - core index']
  #allocation1 [shape = 'u32[144,128]{1,0:T(1,128)}', space=vmem, size = 0x12000, scoped, tag = 'internal scratch']
  #allocation2 [shape = 'f32[24,32]{1,0:T(8,128)}', space=vmem, size = 0x3000, scoped, tag = 'scratch operand']
  %s0 = inlined_call_operand.hbm [shape: bf16[24,24], index: 0, kind: input, shape index: {}]
  %s1 = inlined_call_operand.hbm [shape: bf16[8,16], index: 1, kind: input, shape index: {}]
  %s2 = inlined_call_operand.hbm [shape: f32[24,32], index: 2, kind: input, shape index: {}]
  %s3 = inlined_call_operand.hbm [shape: f32[24,32], index: 3, kind: output, shape index: {0}]
  %s4 = inlined_call_operand.hbm [shape: f32[2,24,32], index: 4, kind: output, shape index: {1}]
  %5 = xla_tuple %s3, %s4
  %s6 = sld [smem:[#allocation0]]
  $region69: #{tpu_custom_call.1} parent=0
    _
  %s8 = ssub.s32 1, %s6
  %s9 = scalar_select 0, %s8, %s6
  $region1: #{tpu_custom_call.1} parent=0
    #allocation3 [shape = 'u8[6144]{0}', space=vmem, size = 0x1800, scoped, tag = 'input window, operand 0, single buffered']
    #allocation4 [shape = 's32[2]{0}', space=sflag, size = 0x8, scoped, tag = 'scoped memory for tpu_custom_call.1']
    #allocation5 [shape = 's32[2]{0}', space=sflag, size = 0x8, scoped, tag = 'scoped memory for tpu_custom_call.1']
    #allocation6 [shape = 'u8[2048]{0}', space=vmem, size = 0x800, scoped, tag = 'input window, operand 1, single buffered']
    #allocation7 [shape = 's32[1]{0}', space=sflag, size = 0x4, scoped, tag = 'scoped memory for tpu_custom_call.1']
    #allocation8 [shape = 'u8[12288]{0}', space=vmem, size = 0x3000, scoped, tag = 'input window, operand 2, single buffered']
    #allocation9 [shape = 'u8[12288]{0}', space=vmem, size = 0x3000, scoped, tag = 'output window, operand 0, single buffered']
    #allocation10 [shape = 'u8[24576]{0}', space=vmem, size = 0x6000, scoped, tag = 'output window, operand 1']
    #allocation11 [shape = 's32[2]{0}', space=sflag, size = 0x8, scoped, tag = 'scoped memory for tpu_custom_call.1']
    %10 = vsyncpa [#allocation4], 0
    %11 = vsyncpa [#allocation7], 0
    %12 = vsyncpa [#allocation5], 0
    %13 = vsyncpa [#allocation11], 0
    %s14 = scalar_lea.sflag [#allocation11], 1
    %15 = vsyncpa %s14, 0
    loop: start=0, step=1, limit=4
    $region2: #{tpu_custom_call.1} parent=1 // loop_pre_header
      _
    $region3: #{tpu_custom_call.1} parent=1 // loop_header
      %s17 = sphi 0, %s21
      %p18 = scmp.ge.s32.totalorder %s17, 4
      %s25 = sphi 0, %s25
      %s27 = sphi 0, %s25
      %s28 = sphi 0, %s27
      %s42 = sphi 0, %s28
      %s46 = sphi 0, %s46
      %s48 = sphi 0, %s46
      %s49 = sphi 0, %s48
      %s63 = sphi 0, %s49
      %s67 = sphi 0, %s67
      %s69 = sphi 0, %s67
      %s70 = sphi 0, %s69
      %s84 = sphi 0, %s70
      %s88 = sphi 0, %s88
      %s90 = sphi 0, %s88
      %s91 = sphi 0, %s90
      %s105 = sphi 0, %s91
      %s111 = sphi 0, %s113
      %s114 = sphi 0, %s111
      %s115 = sphi 0, %s114
      %s131 = sphi 0, %s115
    $region4: #{tpu_custom_call.1} parent=1 // loop_header_branch
      %20 = sbr.rel (%p18) target = $region8
    $region5: #{tpu_custom_call.1} parent=1 // loop_body
      %s22 = ssub.s32 %s17, 1
      %s23 = ssub.s32 %s17, 2
      %s24 = sadd.s32 %s17, 1
      %s26 = sadd.s32 %s25, 1
      %p29 = scmp.eq.s32.totalorder %s17, 1
      %p30 = scmp.ne.s32.totalorder %s25, %s27
      %p31 = scmp.eq.s32.totalorder %s17, 0
      %p32 = por %p30, %p31
      %p33 = scmp.ne.s32.totalorder %s25, %s27
      %p34 = scmp.eq.s32.totalorder %s22, 1
      %p35 = por %p33, %p34
      %p36 = scmp.ne.s32.totalorder %s27, %s28
      %p37 = scmp.eq.s32.totalorder %s22, 0
      %p38 = por %p36, %p37
      %p39 = scmp.ne.s32.totalorder %s27, %s28
      %p40 = scmp.eq.s32.totalorder %s23, 1
      %p41 = por %p39, %p40
      %p43 = scmp.ne.s32.totalorder %s28, %s42
      %p44 = scmp.eq.s32.totalorder %s23, 0
      %p45 = por %p43, %p44
      %s47 = sadd.s32 %s46, 1
      %p50 = scmp.eq.s32.totalorder %s17, 1
      %p51 = scmp.ne.s32.totalorder %s46, %s48
      %p52 = scmp.eq.s32.totalorder %s17, 0
      %p53 = por %p51, %p52
      %p54 = scmp.ne.s32.totalorder %s46, %s48
      %p55 = scmp.eq.s32.totalorder %s22, 1
      %p56 = por %p54, %p55
      %p57 = scmp.ne.s32.totalorder %s48, %s49
      %p58 = scmp.eq.s32.totalorder %s22, 0
      %p59 = por %p57, %p58
      %p60 = scmp.ne.s32.totalorder %s48, %s49
      %p61 = scmp.eq.s32.totalorder %s23, 1
      %p62 = por %p60, %p61
      %p64 = scmp.ne.s32.totalorder %s49, %s63
      %p65 = scmp.eq.s32.totalorder %s23, 0
      %p66 = por %p64, %p65
      %s68 = sadd.s32 %s67, 1
      %p71 = scmp.eq.s32.totalorder %s17, 1
      %p72 = scmp.ne.s32.totalorder %s67, %s69
      %p73 = scmp.eq.s32.totalorder %s17, 0
      %p74 = por %p72, %p73
      %p75 = scmp.ne.s32.totalorder %s67, %s69
      %p76 = scmp.eq.s32.totalorder %s22, 1
      %p77 = por %p75, %p76
      %p78 = scmp.ne.s32.totalorder %s69, %s70
      %p79 = scmp.eq.s32.totalorder %s22, 0
      %p80 = por %p78, %p79
      %p81 = scmp.ne.s32.totalorder %s69, %s70
      %p82 = scmp.eq.s32.totalorder %s23, 1
      %p83 = por %p81, %p82
      %p85 = scmp.ne.s32.totalorder %s70, %s84
      %p86 = scmp.eq.s32.totalorder %s23, 0
      %p87 = por %p85, %p86
      %s89 = sadd.s32 %s88, 1
      %p92 = scmp.eq.s32.totalorder %s17, 1
      %p93 = scmp.ne.s32.totalorder %s88, %s90
      %p94 = scmp.eq.s32.totalorder %s17, 0
      %p95 = por %p93, %p94
      %p96 = scmp.ne.s32.totalorder %s88, %s90
      %p97 = scmp.eq.s32.totalorder %s22, 1
      %p98 = por %p96, %p97
      %p99 = scmp.ne.s32.totalorder %s90, %s91
      %p100 = scmp.eq.s32.totalorder %s22, 0
      %p101 = por %p99, %p100
      %p102 = scmp.ne.s32.totalorder %s90, %s91
      %p103 = scmp.eq.s32.totalorder %s23, 1
      %p104 = por %p102, %p103
      %p106 = scmp.ne.s32.totalorder %s91, %s105
      %p107 = scmp.eq.s32.totalorder %s23, 0
      %p108 = por %p106, %p107
      %s109 = ssub.s32 %s17, %s24
      %p110 = scmp.eq.s32.totalorder %s109, 0
      %s112 = sadd.s32 %s111, 1
      %s113 = scalar_select %p110, %s111, %s112
      %p116 = pneg %p110
      %p117 = scmp.eq.s32.totalorder %s17, 1
      %p118 = por %p116, %p117
      %p119 = scmp.ne.s32.totalorder %s111, %s114
      %p120 = scmp.eq.s32.totalorder %s17, 0
      %p121 = por %p119, %p120
      %p122 = scmp.ne.s32.totalorder %s111, %s114
      %p123 = scmp.eq.s32.totalorder %s22, 1
      %p124 = por %p122, %p123
      %p125 = scmp.ne.s32.totalorder %s114, %s115
      %p126 = scmp.eq.s32.totalorder %s22, 0
      %p127 = por %p125, %p126
      %p128 = scmp.ne.s32.totalorder %s114, %s115
      %p129 = scmp.eq.s32.totalorder %s23, 1
      %p130 = por %p128, %p129
      %p132 = scmp.ne.s32.totalorder %s115, %s131
      %p133 = scmp.eq.s32.totalorder %s23, 0
      %p134 = por %p132, %p133
      %p135 = scmp.le.s32.totalorder 1, %s17
      %p136 = scmp.lt.s32.totalorder %s17, 3
      %p137 = pnand %p135, %p136
      %p138 = pneg %p137
      // Predicated region
      $region9: #{tpu_custom_call.1} parent=5 // pred_check
        _
      $region10: #{tpu_custom_call.1} parent=5 // pred_check_branch
        %140 = sbr.rel (%p137) target = $region12
      $region11: #{tpu_custom_call.1} parent=5 // pred_region
        %s141 = ssub.s32 %s17, 1
        // Predicated region
        $region13: #{tpu_custom_call.1} parent=11 // pred_check
          %p142 = pneg %p38
        $region14: #{tpu_custom_call.1} parent=11 // pred_check_branch
          %144 = sbr.rel (%p142) target = $region16
        $region15: #{tpu_custom_call.1} parent=11 // pred_region
          %s146 = ssub.s32 192, 192
          %147 = vsyncadd [#allocation4], %s146
          %s148 = sshll.u32 [#allocation3], 4
          %s149 = int_to_ptr.vmem [resolvable:$true] %s148
          %154 = dma.hbm_to_vmem [thread:$0]  %s0, 192, %s149, [#allocation4], 64, 64, 4
        $region16: #{tpu_custom_call.1} parent=11 // pred_fallthru
          _
        // Predicated region
        $region17: #{tpu_custom_call.1} parent=11 // pred_check
          %p155 = pneg %p59
        $region18: #{tpu_custom_call.1} parent=11 // pred_check_branch
          %157 = sbr.rel (%p155) target = $region20
        $region19: #{tpu_custom_call.1} parent=11 // pred_region
          %s159 = ssub.s32 64, 64
          %160 = vsyncadd [#allocation7], %s159
          %s162 = sshll.u32 [#allocation6], 4
          %s163 = int_to_ptr.vmem [resolvable:$true] %s162
          %165 = dma.hbm_to_vmem [thread:$0]  %s1, 64, %s163, [#allocation7]
        $region20: #{tpu_custom_call.1} parent=11 // pred_fallthru
          _
        // Predicated region
        $region21: #{tpu_custom_call.1} parent=11 // pred_check
          %p166 = pneg %p80
        $region22: #{tpu_custom_call.1} parent=11 // pred_check_branch
          %168 = sbr.rel (%p166) target = $region24
        $region23: #{tpu_custom_call.1} parent=11 // pred_region
          %s170 = ssub.s32 384, 384
          %171 = vsyncadd [#allocation7], %s170
          %s172 = sshll.u32 [#allocation8], 4
          %s173 = int_to_ptr.vmem [resolvable:$true] %s172
          %178 = dma.hbm_to_vmem [thread:$0]  %s2, 384, %s173, [#allocation7], 128, 128, 8
        $region24: #{tpu_custom_call.1} parent=11 // pred_fallthru
          _
      $region12: #{tpu_custom_call.1} parent=5 // pred_fallthru
        _
      %p179 = scmp.lt.s32.totalorder %s17, 2
      // Predicated region
      $region25: #{tpu_custom_call.1} parent=5 // pred_check
        %p180 = pneg %p179
      $region26: #{tpu_custom_call.1} parent=5 // pred_check_branch
        %182 = sbr.rel (%p180) target = $region28
      $region27: #{tpu_custom_call.1} parent=5 // pred_region
        _
      $region28: #{tpu_custom_call.1} parent=5 // pred_fallthru
        _
      %p183 = scmp.le.s32.totalorder 1, %s17
      %p184 = scmp.lt.s32.totalorder %s17, 3
      %p185 = pnand %p183, %p184
      %p186 = pneg %p185
      // Predicated region
      $region29: #{tpu_custom_call.1} parent=5 // pred_check
        _
      $region30: #{tpu_custom_call.1} parent=5 // pred_check_branch
        %188 = sbr.rel (%p185) target = $region32
      $region31: #{tpu_custom_call.1} parent=5 // pred_region
        %s189 = ssub.s32 %s17, 1
        // Predicated region
        $region33: #{tpu_custom_call.1} parent=31 // pred_check
          %p190 = pneg %p38
        $region34: #{tpu_custom_call.1} parent=31 // pred_check_branch
          %192 = sbr.rel (%p190) target = $region36
        $region35: #{tpu_custom_call.1} parent=31 // pred_region
          %193 = dma.done [#allocation4], 192
        $region36: #{tpu_custom_call.1} parent=31 // pred_fallthru
          _
        // Predicated region
        $region37: #{tpu_custom_call.1} parent=31 // pred_check
          %p194 = pneg %p59
        $region38: #{tpu_custom_call.1} parent=31 // pred_check_branch
          %196 = sbr.rel (%p194) target = $region40
        $region39: #{tpu_custom_call.1} parent=31 // pred_region
          %197 = dma.done [#allocation7], 64
        $region40: #{tpu_custom_call.1} parent=31 // pred_fallthru
          _
        // Predicated region
        $region41: #{tpu_custom_call.1} parent=31 // pred_check
          %p198 = pneg %p80
        $region42: #{tpu_custom_call.1} parent=31 // pred_check_branch
          %200 = sbr.rel (%p198) target = $region44
        $region43: #{tpu_custom_call.1} parent=31 // pred_region
          %201 = dma.done [#allocation7], 384
        $region44: #{tpu_custom_call.1} parent=31 // pred_fallthru
          _
        %p202 = pneg %p38
        %p203 = pneg %p35
        %p204 = pneg %p59
        %p205 = pneg %p56
        %p206 = pneg %p80
        %p207 = pneg %p77
        %p208 = pneg %p101
        %p209 = pneg %p98
        %p210 = pneg %p127
        %p211 = pneg %p124
        %s212 = sand.u32 %s114, 1
        %s213 = scalar_lea.sflag [#allocation11], %s212
        %s214 = sand.u32 %s114, 1
        %s215 = smul.addr %s214, 24
        %s216 = scalar_lea.vmem [#allocation10], %s215
        %p220 = scmp.eq.s32.totalorder %s22, 0
        // Predicated region
        $region45: #{tpu_custom_call.1} parent=31 // pred_check
          %p221 = pneg %p220
        $region46: #{tpu_custom_call.1} parent=31 // pred_check_branch
          %223 = sbr.rel (%p221) target = $region48
        $region47: #{tpu_custom_call.1} parent=31 // pred_region
          %v224 = vld [vmem:[#allocation8] sm:$0xff]
          %v225 = vld [vmem:[#allocation8 + $0x8] sm:$0xff]
          %v226 = vld [vmem:[#allocation8 + $0x10] sm:$0xff]
          %vm227 = vcmask 261120
          %228 = vst.msk [vmem:[#allocation2] sm:$0xff] %vm227, %v224
          %229 = vst.msk [vmem:[#allocation2 + $0x8] sm:$0xff] %vm227, %v225
          %230 = vst.msk [vmem:[#allocation2 + $0x10] sm:$0xff] %vm227, %v226
          %v231 = vld [vmem:[#allocation8] sm:$0xff]
          %v232 = vld [vmem:[#allocation8 + $0x8] sm:$0xff]
          %v233 = vld [vmem:[#allocation8 + $0x10] sm:$0xff]
          %234 = vst.msk [vmem:[#allocation9] sm:$0xff] %vm227, %v231
          %235 = vst.msk [vmem:[#allocation9 + $0x8] sm:$0xff] %vm227, %v232
          %236 = vst.msk [vmem:[#allocation9 + $0x10] sm:$0xff] %vm227, %v233
        $region48: #{tpu_custom_call.1} parent=31 // pred_fallthru
          _
        %v237 = vld [vmem:[#allocation2] sm:$0xff]
        %v238 = vld [vmem:[#allocation2 + $0x8] sm:$0xff]
        %v239 = vld [vmem:[#allocation2 + $0x10] sm:$0xff]
        %v240 = vpack.c.bf16 %v238, %v237
        %v241 = vpack.c.bf16 %v239, %v239
        %v242 = vld [vmem:[#allocation3] sm:$0xf]
        %v243 = vld [vmem:[#allocation3 + $0x4] sm:$0xf]
        %v244 = vld [vmem:[#allocation3 + $0x8] sm:$0xf]
        %v248 = vunpack.c.l.b16 %v242
        %v249 = vunpack.c.l.b16 %v243
        %v250 = vunpack.c.l.b16 %v244
        %v251 = vpack.c.b16 %v249, %v248
        %v252 = vpack.c.b16 %v250, %v250
        %vm253 = vcmask 195584
        %v255 = vsel %vm253, %v251, 0
        %v258 = vsel %vm253, %v252, 0
        %vm260 = vcmask 1043456
        %v262 = vsel %vm260, %v241, 0
        %264 = vmatprep.subr.bf16.mxu0 0
        %265 = vmatpush1.bf16.msra.mxu0 %v240
        %266 = vmatprep.subr.bf16.mxu0 0
        %267 = vmatpush1.bf16.msra.mxu0 %v262
        %268 = vmatprep.subr.bf16.mxu0 0
        %269 = vmatpush1.bf16.msra.mxu0 0
        %270 = vmatprep.subr.bf16.mxu0 0
        %271 = vmatpush1.bf16.msra.mxu0 0
        %272 = vmatprep.subr.bf16.mxu0 0
        %273 = vmatpush1.bf16.msra.mxu0 0
        %274 = vmatprep.subr.bf16.mxu0 0
        %275 = vmatpush1.bf16.msra.mxu0 0
        %276 = vmatprep.subr.bf16.mxu0 0
        %277 = vmatpush1.bf16.msra.mxu0 0
        %278 = vmatprep.subr.bf16.mxu0 0
        %279 = vmatpush1.bf16.msra.mxu0 0
        %280 = vmatprep.subr.bf16.mxu0 0
        %281 = vmatpush1.bf16.msra.mxu0 0
        %282 = vmatprep.subr.bf16.mxu0 0
        %283 = vmatpush1.bf16.msra.mxu0 0
        %284 = vmatprep.subr.bf16.mxu0 0
        %285 = vmatpush1.bf16.msra.mxu0 0
        %286 = vmatprep.subr.bf16.mxu0 0
        %287 = vmatpush1.bf16.msra.mxu0 0
        %288 = vmatprep.subr.bf16.mxu0 0
        %289 = vmatpush1.bf16.msra.mxu0 0
        %290 = vmatprep.subr.bf16.mxu0 0
        %291 = vmatpush1.bf16.msra.mxu0 0
        %292 = vmatprep.subr.bf16.mxu0 0
        %293 = vmatpush1.bf16.msra.mxu0 0
        %294 = vmatprep.subr.bf16.mxu0 0
        %295 = vmatpush1.bf16.msra.mxu0 0
        %296 = vmatprep.mubr.bf16.mxu0 0
        %297 = vmatmul.mubr.bf16.gmra.mrb[0].mxu0 %v255
        %v298 = vpop.f32.mrb[0].mxu0
        %v299 = vadd.f32 0.0, %v298
        %v300 = vpop.f32.mrb[0].mxu0
        %v301 = vpop.f32.mrb[0].mxu0
        %v302 = vadd.f32 0.0, %v301
        %v303 = vpop.f32.mrb[0].mxu0
        %304 = vmatprep.mubr.bf16.mxu0 0
        %305 = vmatmul.mubr.bf16.gmra.mrb[0].mxu0 %v258
        %v306 = vpop.f32.mrb[0].mxu0
        %v307 = vadd.f32 0.0, %v306
        %v308 = vpop.f32.mrb[0].mxu0
        %v309 = vpop.f32.mrb[0].mxu0
        %v310 = vpop.f32.mrb[0].mxu0
        %311 = vdwg.mxu0
        %v312 = vmul.f32 %v299, %v299
        %v313 = vmul.f32 %v302, %v302
        %v314 = vmul.f32 %v307, %v307
        %vm315 = vcmask 261120
        %v316 = vsel %vm315, %v312, 0.0
        %317 = vadd.xlane.f32.xlu0 %v316
        %v318 = vpop.xlane.xlu0 %317
        %v319 = vsel %vm315, %v313, 0.0
        %320 = vadd.xlane.f32.xlu0 %v319
        %v321 = vpop.xlane.xlu0 %320
        %v322 = vsel %vm315, %v314, 0.0
        %323 = vadd.xlane.f32.xlu0 %v322
        %v324 = vpop.xlane.xlu0 %323
        %v325 = vmax.f32 %v318, 1e-24
        %v326 = vmax.f32 %v321, 1e-24
        %v327 = vmax.f32 %v324, 1e-24
        %v328 = vrsqrt.pop %v325
        %v329 = vrsqrt.pop %v326
        %v330 = vrsqrt.pop %v327
        %v331 = vmul.f32 %v299, %v328
        %v332 = vmul.f32 %v302, %v329
        %v333 = vmul.f32 %v307, %v330
        %v334 = vpack.c.bf16 %v331, %v331
        %v335 = vpack.c.bf16 %v333, %v332
        %v336 = vld [vmem:[#allocation6] sm:$0xf]
        %vm337 = vcmp.gt.bf16.partialorder %v336, 0
        %v339 = vsel %vm315, %v334, 0
        %v342 = vsel %vm315, %v335, 0
        %344 = vmatprep.subr.bf16.mxu0 0
        %345 = vmatpush1.bf16.xpose.msra.mxu0 %v342
        %346 = vmatprep.subr.bf16.mxu0 0
        %347 = vmatpush1.bf16.xpose.msra.mxu0 0
        %348 = vmatprep.subr.bf16.mxu0 0
        %349 = vmatpush1.bf16.xpose.msra.mxu0 0
        %350 = vmatprep.subr.bf16.mxu0 0
        %351 = vmatpush1.bf16.xpose.msra.mxu0 0
        %352 = vmatprep.subr.bf16.mxu0 0
        %353 = vmatpush1.bf16.xpose.msra.mxu0 0
        %354 = vmatprep.subr.bf16.mxu0 0
        %355 = vmatpush1.bf16.xpose.msra.mxu0 0
        %356 = vmatprep.subr.bf16.mxu0 0
        %357 = vmatpush1.bf16.xpose.msra.mxu0 0
        %358 = vmatprep.subr.bf16.mxu0 0
        %359 = vmatpush1.bf16.xpose.msra.mxu0 0
        %360 = vmatprep.subr.bf16.mxu0 0
        %361 = vmatpush1.bf16.xpose.msra.mxu0 0
        %362 = vmatprep.subr.bf16.mxu0 0
        %363 = vmatpush1.bf16.xpose.msra.mxu0 0
        %364 = vmatprep.subr.bf16.mxu0 0
        %365 = vmatpush1.bf16.xpose.msra.mxu0 0
        %366 = vmatprep.subr.bf16.mxu0 0
        %367 = vmatpush1.bf16.xpose.msra.mxu0 0
        %368 = vmatprep.subr.bf16.mxu0 0
        %369 = vmatpush1.bf16.xpose.msra.mxu0 0
        %370 = vmatprep.subr.bf16.mxu0 0
        %371 = vmatpush1.bf16.xpose.msra.mxu0 0
        %372 = vmatprep.subr.bf16.mxu0 0
        %373 = vmatpush1.bf16.xpose.msra.mxu0 0
        %374 = vmatprep.subr.bf16.mxu0 0
        %375 = vmatpush1.bf16.xpose.msra.mxu0 0
        %376 = vmatprep.mubr.bf16.mxu0 0
        %377 = vmatmul.mubr.bf16.gmra.mrb[0].mxu0 %v339
        %v378 = vpop.f32.mrb[0].mxu0
        %v379 = vadd.f32 1.0, %v378
        %v380 = vpop.f32.mrb[0].mxu0
        %v381 = vpop.f32.mrb[0].mxu0
        %v382 = vpop.f32.mrb[0].mxu0
        %383 = vdwg.mxu0
        %v384 = vsel %vm337, 65537, 0
        %v385 = vunpack.c.l.b16 %v384
        %vm386 = vcmp.ne.s32.totalorder %v385, 0
        %v387 = vsel %vm386, %v379, 0.0
        %vm388 = vcmask 130048
        %v389 = vsel %vm388, %v387, 0.0
        %390 = vadd.xlane.f32.xlu0 %v389
        %v391 = vpop.xlane.xlu0 %390
        %v392 = vrot.slane %v389, 4
        %v393 = vadd.f32 %v389, %v392
        %v394 = vrot.slane %v393, 2
        %v395 = vadd.f32 %v393, %v394
        %v396 = vrot.slane %v395, 1
        %v397 = vadd.f32 %v395, %v396
        %vm398 = vcmp.gt.f32.partialorder %v391, 0.0
        %v399 = vrcp.pop %v391
        %v400 = vmul.f32 1.0, %v399
        %v401 = vsel %vm398, %v400, 0.0
        %vm402 = vcmp.gt.f32.partialorder %v397, 0.0
        %v403 = vrcp.pop %v397
        %v404 = vmul.f32 1.0, %v403
        %v405 = vsel %vm402, %v404, 0.0
        %v406 = vpack.c.bf16 %v237, %v237
        %v407 = vpack.c.bf16 %v239, %v238
        %v408 = vpack.c.bf16 %v387, %v387
        %v410 = vsel %vm388, %v408, 0
        %412 = vmatprep.subr.bf16.mxu0 0
        %413 = vmatpush1.bf16.msra.mxu0 %v407
        %414 = vmatprep.subr.bf16.mxu0 0
        %415 = vmatpush1.bf16.msra.mxu0 0
        %416 = vmatprep.subr.bf16.mxu0 0
        %417 = vmatpush1.bf16.msra.mxu0 0
        %418 = vmatprep.subr.bf16.mxu0 0
        %419 = vmatpush1.bf16.msra.mxu0 0
        %420 = vmatprep.subr.bf16.mxu0 0
        %421 = vmatpush1.bf16.msra.mxu0 0
        %422 = vmatprep.subr.bf16.mxu0 0
        %423 = vmatpush1.bf16.msra.mxu0 0
        %424 = vmatprep.subr.bf16.mxu0 0
        %425 = vmatpush1.bf16.msra.mxu0 0
        %426 = vmatprep.subr.bf16.mxu0 0
        %427 = vmatpush1.bf16.msra.mxu0 0
        %428 = vmatprep.subr.bf16.mxu0 0
        %429 = vmatpush1.bf16.msra.mxu0 0
        %430 = vmatprep.subr.bf16.mxu0 0
        %431 = vmatpush1.bf16.msra.mxu0 0
        %432 = vmatprep.subr.bf16.mxu0 0
        %433 = vmatpush1.bf16.msra.mxu0 0
        %434 = vmatprep.subr.bf16.mxu0 0
        %435 = vmatpush1.bf16.msra.mxu0 0
        %436 = vmatprep.subr.bf16.mxu0 0
        %437 = vmatpush1.bf16.msra.mxu0 0
        %438 = vmatprep.subr.bf16.mxu0 0
        %439 = vmatpush1.bf16.msra.mxu0 0
        %440 = vmatprep.subr.bf16.mxu0 0
        %441 = vmatpush1.bf16.msra.mxu0 0
        %442 = vmatprep.subr.bf16.mxu0 0
        %443 = vmatpush1.bf16.msra.mxu0 0
        %444 = vmatprep.mubr.bf16.mxu0 0
        %445 = vmatmul.mubr.bf16.gmra.mrb[0].mxu0 %v410
        %v446 = vpop.f32.mrb[0].mxu0
        %v447 = vadd.f32 0.0, %v446
        %v448 = vpop.f32.mrb[0].mxu0
        %v449 = vpop.f32.mrb[0].mxu0
        %v450 = vpop.f32.mrb[0].mxu0
        %451 = vdwg.mxu0
        %v452 = vmul.f32 %v401, %v447
        %v453 = vmul.f32 %v387, %v405
        %v454 = vpack.c.bf16 %v453, %v453
        %455 = vxpose.xlu0.c.b16.start [1/8] %v454, 128
        %456 = vxpose.xlu0.c.b16.cont [2/8] 0, 128
        %457 = vxpose.xlu0.c.b16.cont [3/8] 0, 128
        %458 = vxpose.xlu0.c.b16.cont [4/8] 0, 128
        %459 = vxpose.xlu0.c.b16.cont [5/8] 0, 128
        %460 = vxpose.xlu0.c.b16.cont [6/8] 0, 128
        %461 = vxpose.xlu0.c.b16.cont [7/8] 0, 128
        %462 = vxpose.xlu0.c.b16.end [8/8] 0, 128
        %v463 = vpop.trf.xlu0
        %v464 = vpop.trf.xlu0
        %v465 = vpop.trf.xlu0
        %v466 = vpop.trf.xlu0
        %v467 = vpop.trf.xlu0
        %v468 = vpop.trf.xlu0
        %v469 = vpop.trf.xlu0
        %v470 = vpop.trf.xlu0
        %vm471 = vcmask 64512
        %v473 = vsel %vm471, %v463, 0
        %v476 = vsel %vm260, %v406, 0
        %478 = vmatprep.subr.bf16.mxu0 0
        %479 = vmatpush1.bf16.msra.mxu0 %v476
        %480 = vmatprep.subr.bf16.mxu0 0
        %481 = vmatpush1.bf16.msra.mxu0 0
        %482 = vmatprep.subr.bf16.mxu0 0
        %483 = vmatpush1.bf16.msra.mxu0 0
        %484 = vmatprep.subr.bf16.mxu0 0
        %485 = vmatpush1.bf16.msra.mxu0 0
        %486 = vmatprep.subr.bf16.mxu0 0
        %487 = vmatpush1.bf16.msra.mxu0 0
        %488 = vmatprep.subr.bf16.mxu0 0
        %489 = vmatpush1.bf16.msra.mxu0 0
        %490 = vmatprep.subr.bf16.mxu0 0
        %491 = vmatpush1.bf16.msra.mxu0 0
        %492 = vmatprep.subr.bf16.mxu0 0
        %493 = vmatpush1.bf16.msra.mxu0 0
        %494 = vmatprep.subr.bf16.mxu0 0
        %495 = vmatpush1.bf16.msra.mxu0 0
        %496 = vmatprep.subr.bf16.mxu0 0
        %497 = vmatpush1.bf16.msra.mxu0 0
        %498 = vmatprep.subr.bf16.mxu0 0
        %499 = vmatpush1.bf16.msra.mxu0 0
        %500 = vmatprep.subr.bf16.mxu0 0
        %501 = vmatpush1.bf16.msra.mxu0 0
        %502 = vmatprep.subr.bf16.mxu0 0
        %503 = vmatpush1.bf16.msra.mxu0 0
        %504 = vmatprep.subr.bf16.mxu0 0
        %505 = vmatpush1.bf16.msra.mxu0 0
        %506 = vmatprep.subr.bf16.mxu0 0
        %507 = vmatpush1.bf16.msra.mxu0 0
        %508 = vmatprep.subr.bf16.mxu0 0
        %509 = vmatpush1.bf16.msra.mxu0 0
        %510 = vmatprep.mubr.bf16.mxu0 0
        %511 = vmatmul.mubr.bf16.gmra.mrb[0].mxu0 %v473
        %v512 = vpop.f32.mrb[0].mxu0
        %v513 = vadd.f32 0.0, %v512
        %v514 = vpop.f32.mrb[0].mxu0
        %v515 = vpop.f32.mrb[0].mxu0
        %v516 = vadd.f32 0.0, %v515
        %v517 = vpop.f32.mrb[0].mxu0
        %518 = vdwg.mxu0
        %v519 = vadd.f32 %v299, %v452
        %v520 = vadd.f32 %v302, %v513
        %v521 = vadd.f32 %v307, %v516
        %522 = vst.msk [vmem:[%s216] sm:$0xff] %vm315, %v452
        %523 = vst.msk [vmem:[%s216 + $0x8] sm:$0xff] %vm315, %v513
        %524 = vst.msk [vmem:[%s216 + $0x10] sm:$0xff] %vm315, %v516
        %525 = vst.msk [vmem:[#allocation2] sm:$0xff] %vm315, %v519
        %526 = vst.msk [vmem:[#allocation2 + $0x8] sm:$0xff] %vm315, %v520
        %527 = vst.msk [vmem:[#allocation2 + $0x10] sm:$0xff] %vm315, %v521
        %v528 = vld [vmem:[#allocation9] sm:$0xff]
        %v529 = vld [vmem:[#allocation9 + $0x8] sm:$0xff]
        %v530 = vld [vmem:[#allocation9 + $0x10] sm:$0xff]
        %v531 = vadd.f32 %v528, %v519
        %v532 = vadd.f32 %v529, %v520
        %v533 = vadd.f32 %v530, %v521
        %534 = vst.msk [vmem:[#allocation9] sm:$0xff] %vm315, %v531
        %535 = vst.msk [vmem:[#allocation9 + $0x8] sm:$0xff] %vm315, %v532
        %536 = vst.msk [vmem:[#allocation9 + $0x10] sm:$0xff] %vm315, %v533
        %s537 = sand.u32 %s114, 1
        %s538 = scalar_lea.sflag [#allocation11], %s537
        %s539 = sand.u32 %s114, 1
        %s540 = smul.addr %s539, 24
        %s541 = scalar_lea.vmem [#allocation10], %s540
        // Predicated region
        $region49: #{tpu_custom_call.1} parent=31 // pred_check
          %p542 = pneg %p98
        $region50: #{tpu_custom_call.1} parent=31 // pred_check_branch
          %544 = sbr.rel (%p542) target = $region52
        $region51: #{tpu_custom_call.1} parent=31 // pred_region
          %s546 = ssub.s32 384, 384
          %547 = vsyncadd [#allocation5], %s546
          %s548 = sshll.u32 [#allocation9], 4
          %s549 = int_to_ptr.vmem [resolvable:$true] %s548
          %554 = dma.vmem_to_hbm [thread:$0]  %s549, 384, %s3, [#allocation5], 128, 128, 8
        $region52: #{tpu_custom_call.1} parent=31 // pred_fallthru
          _
        // Predicated region
        $region53: #{tpu_custom_call.1} parent=31 // pred_check
          %p555 = pneg %p124
        $region54: #{tpu_custom_call.1} parent=31 // pred_check_branch
          %557 = sbr.rel (%p555) target = $region56
        $region55: #{tpu_custom_call.1} parent=31 // pred_region
          %s559 = ssub.s32 384, 384
          %560 = vsyncadd %s538, %s559
          %s561 = smul.addr %s22, 3
          %s562 = smul.addr %s561, 128
          %s563 = scalar_lea.hbm %s4, %s562
          %s564 = sshll.u32 %s541, 4
          %s565 = int_to_ptr.vmem [resolvable:$true] %s564
          %570 = dma.vmem_to_hbm [thread:$0]  %s565, 384, %s563, %s538, 128, 128, 8
        $region56: #{tpu_custom_call.1} parent=31 // pred_fallthru
          _
        // Predicated region
        $region57: #{tpu_custom_call.1} parent=31 // pred_check
          %p571 = pneg %p98
        $region58: #{tpu_custom_call.1} parent=31 // pred_check_branch
          %573 = sbr.rel (%p571) target = $region60
        $region59: #{tpu_custom_call.1} parent=31 // pred_region
          %574 = dma.done [#allocation5], 384
        $region60: #{tpu_custom_call.1} parent=31 // pred_fallthru
          _
      $region32: #{tpu_custom_call.1} parent=5 // pred_fallthru
        _
      %p575 = scmp.le.s32.totalorder 2, %s17
      // Predicated region
      $region61: #{tpu_custom_call.1} parent=5 // pred_check
        %p576 = pneg %p575
      $region62: #{tpu_custom_call.1} parent=5 // pred_check_branch
        %578 = sbr.rel (%p576) target = $region64
      $region63: #{tpu_custom_call.1} parent=5 // pred_region
        %s579 = ssub.s32 %s17, 2
        // Predicated region
        $region65: #{tpu_custom_call.1} parent=63 // pred_check
          %p580 = pneg %p130
        $region66: #{tpu_custom_call.1} parent=63 // pred_check_branch
          %582 = sbr.rel (%p580) target = $region68
        $region67: #{tpu_custom_call.1} parent=63 // pred_region
          %s583 = sand.u32 %s115, 1
          %s584 = scalar_lea.sflag [#allocation11], %s583
          %s585 = sand.u32 %s115, 1
          %s586 = smul.addr %s585, 24
          %s587 = scalar_lea.vmem [#allocation10], %s586
          %588 = dma.done %s584, 384
        $region68: #{tpu_custom_call.1} parent=63 // pred_fallthru
          _
      $region64: #{tpu_custom_call.1} parent=5 // pred_fallthru
        _
    $region6: #{tpu_custom_call.1} parent=1 // loop_footer
      %s21 = sadd.s32 1, %s17
    $region7: #{tpu_custom_call.1} parent=1 // loop_footer_branch
      %16 = sbr.rel target = $region3
    $region8: #{tpu_custom_call.1} parent=1 // loop_exit
      _
    %589 = vsyncpa [#allocation4], 1
    %s590 = scalar_lea.sflag [#allocation4], 1
    %591 = vsyncpa %s590, 1
    %592 = vsyncpa [#allocation7], 1
    %593 = vsyncpa [#allocation5], 1
    %s594 = scalar_lea.sflag [#allocation5], 1
    %595 = vsyncpa %s594, 1
    %596 = vsyncpa [#allocation11], 1
    %s597 = scalar_lea.sflag [#allocation11], 1
    %598 = vsyncpa %s597, 1

</llo_original>
